<compile_context>
chip_gen: v5e
topology: v5e:2x2
jax: 0.10.0
libtpu: 0.0.40
codegen_flags: <defaults>
</compile_context>

<pallas_src>
import functools

import jax
import jax.numpy as jnp
from jax.experimental import pallas as pl
from jax.experimental.pallas import tpu as pltpu


def _srm_kernel(x_ref, p_ref, o_ref, *, hw):
    """One (batch-tile, channel-tile) block: x_ref is (b_blk, c_blk, hw)."""
    x = x_ref[...]                                  # input dtype
    xf = x.astype(jnp.float32)

    # Spatial mean / unbiased std, centered two-pass (matches torch.std).
    mean = jnp.sum(xf, axis=-1, keepdims=True) * jnp.float32(1.0 / hw)
    diff = xf - mean
    # hw == 1 is clamped (reference would produce NaN from a 0 divisor).
    var = jnp.sum(diff * diff, axis=-1, keepdims=True) * jnp.float32(
        1.0 / max(hw - 1, 1))
    std = jnp.sqrt(var)

    # Per-channel affine (grouped conv + eval-mode BN already folded): (c_blk, 3)
    p = p_ref[...].astype(jnp.float32)
    z = (mean * p[None, :, 0:1] + std * p[None, :, 1:2] + p[None, :, 2:3])
    g = jax.nn.sigmoid(z)                           # (b_blk, c_blk, 1)

    # Multiply in the input dtype so the store path stays e.g. bf16.
    o_ref[...] = x * g.astype(x.dtype)


def _sublane(dtype_bytes):
    return {1: 32, 2: 16}.get(dtype_bytes, 8)


def _choose_blocks(b, c, hw, dtype_bytes):
    """Pick (b_blk, c_blk) from a VMEM working budget (f32 temps included)."""
    sub = _sublane(dtype_bytes)
    hw_lanes = pl.cdiv(hw, 128) * 128               # VMEM lane footprint per row
    # 4x dtype buffers (double-buffered in+out) + ~3 f32-wide temporaries.
    budget_elems = (28 << 20) // (4 * dtype_bytes + 12)
    rows_fit = max(1, budget_elems // hw_lanes)

    c_full = pl.cdiv(c, sub) * sub
    if c <= sub or c_full <= rows_fit:
        c_blk = c
        b_blk = max(1, min(b, rows_fit // max(c_full, 1)))
    else:
        c_blk = max(sub, min(rows_fit, c_full) // sub * sub)
        b_blk = 1

    # Prefer >= 2 grid steps (megacore), and an even step count on v7x.
    steps_b, steps_c = pl.cdiv(b, b_blk), pl.cdiv(c, c_blk)
    if steps_b * steps_c == 1:
        if b >= 2:
            b_blk = pl.cdiv(b, 2)
        elif c > sub:
            c_blk = max(sub, pl.cdiv(pl.cdiv(c, 2), sub) * sub)
    elif (steps_b * steps_c) % 2 == 1 and b_blk > 1:
        for nb in range(b_blk - 1, max(0, b_blk - 9), -1):
            if (pl.cdiv(b, nb) * steps_c) % 2 == 0:
                b_blk = nb
                break
    return int(b_blk), int(c_blk)


def srm_forward(x, conv_w, bn_gamma, bn_beta, bn_rmean, bn_rvar, *,
                eps=1e-5, block_override=None):
    """x: (B, C, H, W). conv_w: (C, 1, 2). BN params: (C,)."""
    b, c, h, w = x.shape
    hw = h * w

    # ---- fold eval-mode BatchNorm into the grouped-conv weights --------------
    inv = jax.lax.rsqrt(bn_rvar.astype(jnp.float32) + jnp.float32(eps))
    scale = bn_gamma.astype(jnp.float32) * inv                        # (C,)
    a0 = scale * conv_w[:, 0, 0].astype(jnp.float32)                  # * mean
    a1 = scale * conv_w[:, 0, 1].astype(jnp.float32)                  # * std
    bias = bn_beta.astype(jnp.float32) - scale * bn_rmean.astype(jnp.float32)
    params = jnp.stack([a0, a1, bias], axis=-1)                       # (C, 3)

    # ---- free view; no padding, no output slice ------------------------------
    x3 = x.reshape(b, c, hw)
    dtype_bytes = jnp.dtype(x.dtype).itemsize
    if block_override is not None:
        b_blk, c_blk = block_override
    else:
        b_blk, c_blk = _choose_blocks(b, c, hw, dtype_bytes)

    # Explicit VMEM budget: double-buffered in/out blocks (+ f32 intermediates
    # for the cast / centered diff) + small headroom; capped at 48 MiB so v7x
    # (64 MiB physical) keeps compiler-scratch headroom.
    sub = _sublane(dtype_bytes)
    hw_lanes = pl.cdiv(hw, 128) * 128
    c_pad = min(pl.cdiv(c_blk, sub) * sub, pl.cdiv(c, sub) * sub)
    blk_elems = b_blk * c_pad * hw_lanes
    vmem_est = 4 * blk_elems * dtype_bytes + 3 * blk_elems * 4 + (2 << 20)
    vmem_limit = int(min(48 << 20, max(16 << 20, vmem_est)))
    # TODO(synk): for very large H*W (per-row footprint beyond the VMEM budget,
    # e.g. f32 512x512 spatial on v7x) add a lane-chunked stats+apply path.

    grid = (pl.cdiv(b, b_blk), pl.cdiv(c, c_blk))

    out3 = pl.pallas_call(
        functools.partial(_srm_kernel, hw=hw),
        out_shape=jax.ShapeDtypeStruct((b, c, hw), x.dtype),
        grid_spec=pltpu.PrefetchScalarGridSpec(
            num_scalar_prefetch=0,
            grid=grid,
            in_specs=[
                pl.BlockSpec((b_blk, c_blk, hw), lambda bi, ci: (bi, ci, 0)),
                pl.BlockSpec((c_blk, 3), lambda bi, ci: (ci, 0)),
            ],
            out_specs=pl.BlockSpec((b_blk, c_blk, hw), lambda bi, ci: (bi, ci, 0)),
        ),
        compiler_params=pltpu.CompilerParams(
            dimension_semantics=("parallel", "parallel"),
            vmem_limit_bytes=vmem_limit,
        ),
    )(x3, params)

    return out3.reshape(b, c, h, w)


def srm_reference(x, conv_w, bn_gamma, bn_beta, bn_rmean, bn_rvar):
    """Pure-JAX reference mirroring the PyTorch forward (eval-mode BN)."""
    b, c, h, w = x.shape
    xf = x.reshape(b, c, -1).astype(jnp.float32)
    mean = xf.mean(-1)                                           # (B, C)
    std = jnp.sqrt(((xf - mean[..., None]) ** 2).sum(-1) / max(h * w - 1, 1))
    z = conv_w[:, 0, 0][None, :] * mean + conv_w[:, 0, 1][None, :] * std
    z = bn_gamma * (z - bn_rmean) * jax.lax.rsqrt(bn_rvar + 1e-5) + bn_beta
    g = jax.nn.sigmoid(z)
    return x * g[:, :, None, None].astype(x.dtype)


def _make_params(key, c):
    k_w, k_g, k_b, k_rm, k_rv = jax.random.split(key, 5)
    conv_w = jax.random.normal(k_w, (c, 1, 2), dtype=jnp.float32) * 0.5
    bn_gamma = 1.0 + 0.1 * jax.random.normal(k_g, (c,), dtype=jnp.float32)
    bn_beta = 0.1 * jax.random.normal(k_b, (c,), dtype=jnp.float32)
    bn_rmean = 0.1 * jax.random.normal(k_rm, (c,), dtype=jnp.float32)
    bn_rvar = jnp.abs(1.0 + 0.1 * jax.random.normal(k_rv, (c,), dtype=jnp.float32))
    return conv_w, bn_gamma, bn_beta, bn_rmean, bn_rvar


if __name__ == "__main__":
    key = jax.random.PRNGKey(0)

    # (shape, dtype, block_override, atol/rtol)
    cases = [
        ((2, 4, 16, 16), jnp.float32, None, 1e-5),      # primary spec shape
        ((2, 16, 16, 16), jnp.float32, None, 1e-5),     # larger C, batch-tiled grid
        ((3, 5, 10, 10), jnp.float32, None, 1e-5),      # non-128 H*W, partial batch tile
        ((2, 20, 8, 8), jnp.float32, (1, 8), 1e-5),     # forced channel tiling w/ OOB tail
        ((2, 4, 16, 16), jnp.bfloat16, None, 2e-2),     # bf16 (16-row sublane path)
    ]
    for idx, ((B, C, H, W), dt, blk, tol) in enumerate(cases):
        k_x, k_p = jax.random.split(jax.random.fold_in(key, idx))
        x = jax.random.normal(k_x, (B, C, H, W), dtype=jnp.float32).astype(dt)
        conv_w, bn_gamma, bn_beta, bn_rmean, bn_rvar = _make_params(k_p, C)

        out = srm_forward(x, conv_w, bn_gamma, bn_beta, bn_rmean, bn_rvar,
                          block_override=blk)
        out = jax.block_until_ready(out)

        ref = srm_reference(x, conv_w, bn_gamma, bn_beta, bn_rmean, bn_rvar)
        assert out.shape == (B, C, H, W)
        assert jnp.allclose(out.astype(jnp.float32), ref.astype(jnp.float32),
                            atol=tol, rtol=tol), (
            f"mismatch vs reference for shape {(B, C, H, W)} dtype {dt}"
        )

    print("KERNEL_OK")
</pallas_src>

<mosaic_0001>
module attributes {stable_mosaic.version = 11 : i64} {
  func.func @_srm_kernel(%arg0: i32, %arg1: i32, %arg2: memref<1x4x256xf32, #tpu.memory_space<vmem>>, %arg3: memref<4x3xf32, #tpu.memory_space<vmem>>, %arg4: memref<1x4x256xf32, #tpu.memory_space<vmem>>) attributes {dimension_semantics = [#tpu.dimension_semantics<parallel>, #tpu.dimension_semantics<parallel>], iteration_bounds = array<i64: 2, 1>, scalar_prefetch = 0 : i64, scratch_operands = 0 : i64, tpu.core_type = #tpu.core_type<tc>, window_params = [{transform_indices = @transform_0, window_bounds = array<i64: 1, 4, 256>}, {transform_indices = @transform_1, window_bounds = array<i64: 4, 3>}, {transform_indices = @transform_2, window_bounds = array<i64: 1, 4, 256>}]} {
    %c0 = arith.constant 0 : index
    %c0_0 = arith.constant 0 : index
    %c0_1 = arith.constant 0 : index
    %0 = vector.load %arg2[%c0, %c0_0, %c0_1] : memref<1x4x256xf32, #tpu.memory_space<vmem>>, vector<1x4x256xf32>
    %cst = arith.constant dense<0.000000e+00> : vector<1x4xf32>
    %1 = vector.multi_reduction <add>, %0, %cst [2] : vector<1x4x256xf32> to vector<1x4xf32>
    %2 = vector.shape_cast %1 : vector<1x4xf32> to vector<1x4x1xf32>
    %cst_2 = arith.constant 3.906250e-03 : f32
    %3 = vector.broadcast %cst_2 : f32 to vector<1x4x1xf32>
    %4 = arith.mulf %2, %3 : vector<1x4x1xf32>
    %5 = vector.broadcast %4 : vector<1x4x1xf32> to vector<1x4x256xf32>
    %6 = arith.subf %0, %5 : vector<1x4x256xf32>
    %7 = arith.mulf %6, %6 : vector<1x4x256xf32>
    %cst_3 = arith.constant dense<0.000000e+00> : vector<1x4xf32>
    %8 = vector.multi_reduction <add>, %7, %cst_3 [2] : vector<1x4x256xf32> to vector<1x4xf32>
    %9 = vector.shape_cast %8 : vector<1x4xf32> to vector<1x4x1xf32>
    %cst_4 = arith.constant 0.00392156886 : f32
    %10 = vector.broadcast %cst_4 : f32 to vector<1x4x1xf32>
    %11 = arith.mulf %9, %10 : vector<1x4x1xf32>
    %12 = math.sqrt %11 : vector<1x4x1xf32>
    %c0_5 = arith.constant 0 : index
    %c0_6 = arith.constant 0 : index
    %13 = vector.load %arg3[%c0_5, %c0_6] : memref<4x3xf32, #tpu.memory_space<vmem>>, vector<4x3xf32>
    %14 = vector.extract_strided_slice %13 {offsets = [0, 0], sizes = [4, 1], strides = [1, 1]} : vector<4x3xf32> to vector<4x1xf32>
    %15 = vector.shape_cast %14 : vector<4x1xf32> to vector<1x4x1xf32>
    %16 = arith.mulf %4, %15 : vector<1x4x1xf32>
    %17 = vector.extract_strided_slice %13 {offsets = [0, 1], sizes = [4, 1], strides = [1, 1]} : vector<4x3xf32> to vector<4x1xf32>
    %18 = vector.shape_cast %17 : vector<4x1xf32> to vector<1x4x1xf32>
    %19 = arith.mulf %12, %18 : vector<1x4x1xf32>
    %20 = arith.addf %16, %19 : vector<1x4x1xf32>
    %21 = vector.extract_strided_slice %13 {offsets = [0, 2], sizes = [4, 1], strides = [1, 1]} : vector<4x3xf32> to vector<4x1xf32>
    %22 = vector.shape_cast %21 : vector<4x1xf32> to vector<1x4x1xf32>
    %23 = arith.addf %20, %22 : vector<1x4x1xf32>
    %24 = arith.negf %23 : vector<1x4x1xf32>
    %25 = math.exp %24 : vector<1x4x1xf32>
    %cst_7 = arith.constant 1.000000e+00 : f32
    %26 = vector.broadcast %cst_7 : f32 to vector<1x4x1xf32>
    %27 = arith.addf %26, %25 : vector<1x4x1xf32>
    %28 = arith.divf %26, %27 : vector<1x4x1xf32>
    %29 = vector.broadcast %28 : vector<1x4x1xf32> to vector<1x4x256xf32>
    %30 = arith.mulf %0, %29 : vector<1x4x256xf32>
    %c0_8 = arith.constant 0 : index
    %c0_9 = arith.constant 0 : index
    %c0_10 = arith.constant 0 : index
    %31 = vector.load %arg4[%c0_8, %c0_9, %c0_10] : memref<1x4x256xf32, #tpu.memory_space<vmem>>, vector<1x4x256xf32>
    tpu.vector_store %arg4[%c0_8, %c0_9, %c0_10], %30 {strides = array<i32>} : memref<1x4x256xf32, #tpu.memory_space<vmem>>, vector<1x4x256xf32>,
    return
  }
  func.func @transform_0(%arg0: i32, %arg1: i32) -> (i32, i32, i32) {
    %c0_i32 = arith.constant 0 : i32
    %c0_i32_0 = arith.constant 0 : i32
    return %arg0, %arg1, %c0_i32 : i32, i32, i32
  }
  func.func @transform_1(%arg0: i32, %arg1: i32) -> (i32, i32) {
    %c0_i32 = arith.constant 0 : i32
    %c0_i32_0 = arith.constant 0 : i32
    return %arg1, %c0_i32 : i32, i32
  }
  func.func @transform_2(%arg0: i32, %arg1: i32) -> (i32, i32, i32) {
    %c0_i32 = arith.constant 0 : i32
    %c0_i32_0 = arith.constant 0 : i32
    return %arg0, %arg1, %c0_i32 : i32, i32, i32
  }
}

</mosaic_0001>

<llo_original>
// kernel: tpu_custom_call.1
$region0: #{tpu_custom_call.1}
  #allocation0 [shape = 'u32[]', space=smem, size = 0x4, offset = 0x4, fixed_abs, tag = 'smem constant byte address 0x4 - core index']
  #allocation1 [shape = 'u32[72,128]{1,0:T(1,128)}', space=vmem, size = 0x9000, scoped, tag = 'internal scratch']
  %s0 = inlined_call_operand.hbm [shape: f32[2,4,256], index: 0, kind: input, shape index: {}]
  %s1 = inlined_call_operand.hbm [shape: f32[4,3], index: 1, kind: input, shape index: {}]
  %s2 = inlined_call_operand.hbm [shape: f32[2,4,256], index: 2, kind: output, shape index: {}]
  %s3 = sld [smem:[#allocation0]]
  $region49: #{tpu_custom_call.1} parent=0
    _
  %s5 = ssub.s32 1, %s3
  %s6 = scalar_select 0, %s5, %s3
  $region1: #{tpu_custom_call.1} parent=0
    #allocation2 [shape = 'u8[8192]{0}', space=vmem, size = 0x2000, scoped, tag = 'input window, operand 0']
    #allocation3 [shape = 's32[2]{0}', space=sflag, size = 0x8, scoped, tag = 'scoped memory for tpu_custom_call.1']
    #allocation4 [shape = 's32[2]{0}', space=sflag, size = 0x8, scoped, tag = 'scoped memory for tpu_custom_call.1']
    #allocation5 [shape = 'u8[2048]{0}', space=vmem, size = 0x800, scoped, tag = 'input window, operand 1, single buffered']
    #allocation6 [shape = 's32[1]{0}', space=sflag, size = 0x4, scoped, tag = 'scoped memory for tpu_custom_call.1']
    #allocation7 [shape = 'u8[8192]{0}', space=vmem, size = 0x2000, scoped, tag = 'output window, operand 0']
    %7 = vsyncpa [#allocation3], 0
    %s8 = scalar_lea.sflag [#allocation3], 1
    %9 = vsyncpa %s8, 0
    %10 = vsyncpa [#allocation6], 0
    %11 = vsyncpa [#allocation4], 0
    %s12 = scalar_lea.sflag [#allocation4], 1
    %13 = vsyncpa %s12, 0
    loop: start=0, step=1, limit=4
    $region2: #{tpu_custom_call.1} parent=1 // loop_pre_header
      _
    $region3: #{tpu_custom_call.1} parent=1 // loop_header
      %s15 = sphi 0, %s19
      %p16 = scmp.ge.s32.totalorder %s15, 4
      %s22 = sphi 0, %s34
      %s23 = sphi 0, %s30
      %s24 = sphi 0, %s22
      %s25 = sphi 0, %s23
      %s26 = sphi 0, %s24
      %s27 = sphi 0, %s25
      %s39 = sphi 0, %s41
      %s42 = sphi 0, %s39
      %s43 = sphi 0, %s42
      %s59 = sphi 0, %s43
      %s65 = sphi 0, %s67
      %s68 = sphi 0, %s65
      %s69 = sphi 0, %s68
      %s85 = sphi 0, %s69
      %s93 = sphi 0, %s95
      %s96 = sphi 0, %s93
      %s97 = sphi 0, %s96
      %s113 = sphi 0, %s97
    $region4: #{tpu_custom_call.1} parent=1 // loop_header_branch
      %18 = sbr.rel (%p16) target = $region8
    $region5: #{tpu_custom_call.1} parent=1 // loop_body
      %s20 = ssub.s32 %s15, 1
      %s21 = ssub.s32 %s15, 2
      %s28 = sadd.s32 1, %s23
      %p29 = scmp.ge.s32.totalorder %s28, 1
      %s30 = scalar_select %p29, 0, %s28
      %s31 = sadd.s32 1, %s22
      %s32 = scalar_select %p29, %s31, %s22
      %p33 = scmp.ge.s32.totalorder %s32, 2
      %s34 = scalar_select %p33, 0, %s32
      %s35 = ssub.s32 %s22, %s34
      %s36 = ssub.s32 %s23, %s30
      %s37 = sor.u32 %s35, %s36
      %p38 = scmp.eq.s32.totalorder %s37, 0
      %s40 = sadd.s32 %s39, 1
      %s41 = scalar_select %p38, %s39, %s40
      %p44 = pneg %p38
      %p45 = scmp.eq.s32.totalorder %s15, 1
      %p46 = por %p44, %p45
      %p47 = scmp.ne.s32.totalorder %s39, %s42
      %p48 = scmp.eq.s32.totalorder %s15, 0
      %p49 = por %p47, %p48
      %p50 = scmp.ne.s32.totalorder %s39, %s42
      %p51 = scmp.eq.s32.totalorder %s20, 1
      %p52 = por %p50, %p51
      %p53 = scmp.ne.s32.totalorder %s42, %s43
      %p54 = scmp.eq.s32.totalorder %s20, 0
      %p55 = por %p53, %p54
      %p56 = scmp.ne.s32.totalorder %s42, %s43
      %p57 = scmp.eq.s32.totalorder %s21, 1
      %p58 = por %p56, %p57
      %p60 = scmp.ne.s32.totalorder %s43, %s59
      %p61 = scmp.eq.s32.totalorder %s21, 0
      %p62 = por %p60, %p61
      %s63 = ssub.s32 %s23, %s30
      %p64 = scmp.eq.s32.totalorder %s63, 0
      %s66 = sadd.s32 %s65, 1
      %s67 = scalar_select %p64, %s65, %s66
      %p70 = pneg %p64
      %p71 = scmp.eq.s32.totalorder %s15, 1
      %p72 = por %p70, %p71
      %p73 = scmp.ne.s32.totalorder %s65, %s68
      %p74 = scmp.eq.s32.totalorder %s15, 0
      %p75 = por %p73, %p74
      %p76 = scmp.ne.s32.totalorder %s65, %s68
      %p77 = scmp.eq.s32.totalorder %s20, 1
      %p78 = por %p76, %p77
      %p79 = scmp.ne.s32.totalorder %s68, %s69
      %p80 = scmp.eq.s32.totalorder %s20, 0
      %p81 = por %p79, %p80
      %p82 = scmp.ne.s32.totalorder %s68, %s69
      %p83 = scmp.eq.s32.totalorder %s21, 1
      %p84 = por %p82, %p83
      %p86 = scmp.ne.s32.totalorder %s69, %s85
      %p87 = scmp.eq.s32.totalorder %s21, 0
      %p88 = por %p86, %p87
      %s89 = ssub.s32 %s22, %s34
      %s90 = ssub.s32 %s23, %s30
      %s91 = sor.u32 %s89, %s90
      %p92 = scmp.eq.s32.totalorder %s91, 0
      %s94 = sadd.s32 %s93, 1
      %s95 = scalar_select %p92, %s93, %s94
      %p98 = pneg %p92
      %p99 = scmp.eq.s32.totalorder %s15, 1
      %p100 = por %p98, %p99
      %p101 = scmp.ne.s32.totalorder %s93, %s96
      %p102 = scmp.eq.s32.totalorder %s15, 0
      %p103 = por %p101, %p102
      %p104 = scmp.ne.s32.totalorder %s93, %s96
      %p105 = scmp.eq.s32.totalorder %s20, 1
      %p106 = por %p104, %p105
      %p107 = scmp.ne.s32.totalorder %s96, %s97
      %p108 = scmp.eq.s32.totalorder %s20, 0
      %p109 = por %p107, %p108
      %p110 = scmp.ne.s32.totalorder %s96, %s97
      %p111 = scmp.eq.s32.totalorder %s21, 1
      %p112 = por %p110, %p111
      %p114 = scmp.ne.s32.totalorder %s97, %s113
      %p115 = scmp.eq.s32.totalorder %s21, 0
      %p116 = por %p114, %p115
      %p117 = scmp.le.s32.totalorder 1, %s15
      %p118 = scmp.lt.s32.totalorder %s15, 3
      %p119 = pnand %p117, %p118
      %p120 = pneg %p119
      // Predicated region
      $region9: #{tpu_custom_call.1} parent=5 // pred_check
        _
      $region10: #{tpu_custom_call.1} parent=5 // pred_check_branch
        %122 = sbr.rel (%p119) target = $region12
      $region11: #{tpu_custom_call.1} parent=5 // pred_region
        %s123 = ssub.s32 %s15, 1
        // Predicated region
        $region13: #{tpu_custom_call.1} parent=11 // pred_check
          %p124 = pneg %p81
        $region14: #{tpu_custom_call.1} parent=11 // pred_check_branch
          %126 = sbr.rel (%p124) target = $region16
        $region15: #{tpu_custom_call.1} parent=11 // pred_region
          %128 = vsyncadd [#allocation6], 0
          %s129 = smul.addr %s25, 4
          %s130 = scalar_lea.hbm %s1, %s129
          %s132 = sshll.u32 %s130, 4
          %s133 = int_to_ptr.hbm [resolvable:$true] %s132
          %s134 = sshll.u32 [#allocation5], 4
          %s135 = int_to_ptr.vmem [resolvable:$true] %s134
          %137 = dma.hbm_to_vmem [thread:$0]  %s133, 64, %s135, [#allocation6]
        $region16: #{tpu_custom_call.1} parent=11 // pred_fallthru
          _
      $region12: #{tpu_custom_call.1} parent=5 // pred_fallthru
        _
      %p138 = scmp.lt.s32.totalorder %s15, 2
      // Predicated region
      $region17: #{tpu_custom_call.1} parent=5 // pred_check
        %p139 = pneg %p138
      $region18: #{tpu_custom_call.1} parent=5 // pred_check_branch
        %141 = sbr.rel (%p139) target = $region20
      $region19: #{tpu_custom_call.1} parent=5 // pred_region
        // Predicated region
        $region21: #{tpu_custom_call.1} parent=19 // pred_check
          %p142 = pneg %p49
        $region22: #{tpu_custom_call.1} parent=19 // pred_check_branch
          %144 = sbr.rel (%p142) target = $region24
        $region23: #{tpu_custom_call.1} parent=19 // pred_region
          %s145 = sand.u32 %s39, 1
          %s146 = scalar_lea.sflag [#allocation3], %s145
          %s147 = sand.u32 %s39, 1
          %s148 = smul.addr %s147, 8
          %s149 = scalar_lea.vmem [#allocation2], %s148
          %151 = vsyncadd %s146, 0
          %s152 = smul.addr %s23, 2
          %s153 = smul.addr %s22, 2
          %s154 = sadd.s32 %s152, %s153
          %s155 = smul.addr %s154, 4
          %s156 = scalar_lea.hbm %s0, %s155
          %s158 = sshll.u32 %s156, 4
          %s159 = int_to_ptr.hbm [resolvable:$true] %s158
          %s160 = sshll.u32 %s149, 4
          %s161 = int_to_ptr.vmem [resolvable:$true] %s160
          %163 = dma.hbm_to_vmem [thread:$0]  %s159, 128, %s161, %s146
        $region24: #{tpu_custom_call.1} parent=19 // pred_fallthru
          _
      $region20: #{tpu_custom_call.1} parent=5 // pred_fallthru
        _
      %p164 = scmp.le.s32.totalorder 1, %s15
      %p165 = scmp.lt.s32.totalorder %s15, 3
      %p166 = pnand %p164, %p165
      %p167 = pneg %p166
      // Predicated region
      $region25: #{tpu_custom_call.1} parent=5 // pred_check
        _
      $region26: #{tpu_custom_call.1} parent=5 // pred_check_branch
        %169 = sbr.rel (%p166) target = $region28
      $region27: #{tpu_custom_call.1} parent=5 // pred_region
        %s170 = ssub.s32 %s15, 1
        %s171 = sand.u32 %s42, 1
        %s172 = scalar_lea.sflag [#allocation3], %s171
        %s173 = sand.u32 %s42, 1
        %s174 = smul.addr %s173, 8
        %s175 = scalar_lea.vmem [#allocation2], %s174
        // Predicated region
        $region29: #{tpu_custom_call.1} parent=27 // pred_check
          %p176 = pneg %p55
        $region30: #{tpu_custom_call.1} parent=27 // pred_check_branch
          %178 = sbr.rel (%p176) target = $region32
        $region31: #{tpu_custom_call.1} parent=27 // pred_region
          %180 = dma.done %s172, 128
        $region32: #{tpu_custom_call.1} parent=27 // pred_fallthru
          _
        // Predicated region
        $region33: #{tpu_custom_call.1} parent=27 // pred_check
          %p181 = pneg %p81
        $region34: #{tpu_custom_call.1} parent=27 // pred_check_branch
          %183 = sbr.rel (%p181) target = $region36
        $region35: #{tpu_custom_call.1} parent=27 // pred_region
          %185 = dma.done [#allocation6], 64
        $region36: #{tpu_custom_call.1} parent=27 // pred_fallthru
          _
        %s186 = sand.u32 %s42, 1
        %s187 = scalar_lea.sflag [#allocation3], %s186
        %s188 = sand.u32 %s42, 1
        %s189 = smul.addr %s188, 8
        %s190 = scalar_lea.vmem [#allocation2], %s189
        %p191 = pneg %p55
        %p192 = pneg %p52
        %p193 = pneg %p81
        %p194 = pneg %p78
        %p195 = pneg %p109
        %p196 = pneg %p106
        %s197 = sand.u32 %s96, 1
        %s198 = scalar_lea.sflag [#allocation4], %s197
        %s199 = sand.u32 %s96, 1
        %s200 = smul.addr %s199, 8
        %s201 = scalar_lea.vmem [#allocation7], %s200
        %v202 = vld [vmem:[%s175] sm:$0xff]
        %204 = vst [vmem:[#allocation1] ss:$2 sm:$0xff] %v202
        %v205 = vld.sshfl [vmem:[#allocation1] sm:$0xff pattern:$0x75316420]
        %v206 = vld.sshfl [vmem:[#allocation1 + $0x8] sm:$0xff pattern:$0x75316420]
        %vm209 = vcmask 1043456
        %v210 = vsel %vm209, %v205, 0.0
        %v211 = vsel %vm209, %v206, 0.0
        %v212 = vadd.f32 %v210, %v211
        %213 = vadd.xlane.f32.xlu0 %v212
        %v214 = vpop.xlane.xlu0 %213
        %v215 = vmul.f32 %v214, 0.00390625
        %v218 = vunpack.c.l.s4 839922192
        %v219 = vunpack.c.0.s8 %v218
        %v220 = vperm.slane %v215, %v219
        %v222 = vsub.f32 %v202, %v220
        %v223 = vmul.f32 %v222, %v222
        %225 = vst [vmem:[#allocation1] ss:$2 sm:$0xff] %v223
        %v226 = vld.sshfl [vmem:[#allocation1] sm:$0xff pattern:$0x75316420]
        %v227 = vld.sshfl [vmem:[#allocation1 + $0x8] sm:$0xff pattern:$0x75316420]
        %v230 = vsel %vm209, %v226, 0.0
        %v231 = vsel %vm209, %v227, 0.0
        %v232 = vadd.f32 %v230, %v231
        %233 = vadd.xlane.f32.xlu0 %v232
        %v234 = vpop.xlane.xlu0 %233
        %v235 = vmul.f32 %v234, 0.003921569
        %v236 = vrsqrt.pop %v235
        %v237 = vmul.f32 %v236, %v235
        %v238 = vmul.f32 %v237, %v236
        %v239 = vmul.f32 0.5, %v238
        %v240 = vsub.f32 1.5, %v239
        %v241 = vmul.f32 %v236, %v240
        %v242 = vmul.f32 %v235, %v241
        %vm243 = vcmp.eq.f32.partialorder %v235, inf
        %v244 = vsel %vm243, %v235, %v242
        %vm245 = vcmp.eq.f32.partialorder %v235, 0.0
        %v246 = vand.u32 %v235, 2147483648
        %v247 = vsel %vm245, %v246, %v244
        %v248 = vld [vmem:[#allocation5] sm:$0xf]
        %v249 = vmul.f32 %v215, %v248
        %v250 = vmul.f32 %v247, %v248
        %252 = vrot.lane.b32.xlu0 %v250, 127
        %v253 = vpop.permute.xlu0 %252
        %v255 = vadd.f32 %v249, %v253
        %257 = vrot.lane.b32.xlu0 %v248, 126
        %v258 = vpop.permute.xlu0 %257
        %v260 = vadd.f32 %v255, %v258
        %v261 = vxor.u32 %v260, 2147483648
        %v262 = vmul.f32 %v261, 1.442695
        %v263 = vpow.pop %v262
        %v264 = vadd.f32 %v263, 1.0
        %v265 = vrcp.pop %v264
        %v266 = vmul.f32 %v264, %v265
        %v267 = vsub.f32 1.0, %v266
        %v268 = vmul.f32 %v265, %v267
        %v269 = vadd.f32 %v265, %v268
        %vm270 = vweird.f32 %v264
        %vm271 = vweird.f32 %v265
        %vm272 = vmor %vm270, %vm271
        %v273 = vsel %vm272, %v265, %v269
        %v274 = vand.u32 2147483647, %v264
        %vm275 = vcmp.eq.f32.partialorder %v274, 8.507059e+37
        %v276 = vand.u32 %v264, 2147483648
        %v277 = vor.u32 1.1754944e-38, %v276
        %v278 = vsel %vm275, %v277, %v273
        %v279 = vmul.f32 1.0, %v278
        %281 = vset.pattern.permute.xlu0 0
        %282 = vperm.xlu0 %281, %v279
        %v283 = vpop.permute.xlu0 %282
        %v285 = vunpack.c.l.s4 839922192
        %v286 = vunpack.c.0.s8 %v285
        %v287 = vperm.slane %v283, %v286
        %v289 = vmul.f32 %v202, %v287
        %290 = vst [vmem:[%s201] sm:$0xff] %v289
        %s291 = sand.u32 %s96, 1
        %s292 = scalar_lea.sflag [#allocation4], %s291
        %s293 = sand.u32 %s96, 1
        %s294 = smul.addr %s293, 8
        %s295 = scalar_lea.vmem [#allocation7], %s294
        // Predicated region
        $region37: #{tpu_custom_call.1} parent=27 // pred_check
          %p296 = pneg %p106
        $region38: #{tpu_custom_call.1} parent=27 // pred_check_branch
          %298 = sbr.rel (%p296) target = $region40
        $region39: #{tpu_custom_call.1} parent=27 // pred_region
          %300 = vsyncadd %s292, 0
          %s301 = smul.addr %s25, 2
          %s302 = smul.addr %s24, 2
          %s303 = sadd.s32 %s301, %s302
          %s304 = smul.addr %s303, 4
          %s305 = scalar_lea.hbm %s2, %s304
          %s307 = sshll.u32 %s295, 4
          %s308 = int_to_ptr.vmem [resolvable:$true] %s307
          %s309 = sshll.u32 %s305, 4
          %s310 = int_to_ptr.hbm [resolvable:$true] %s309
          %312 = dma.vmem_to_hbm [thread:$0]  %s308, 128, %s310, %s292
        $region40: #{tpu_custom_call.1} parent=27 // pred_fallthru
          _
      $region28: #{tpu_custom_call.1} parent=5 // pred_fallthru
        _
      %p313 = scmp.le.s32.totalorder 2, %s15
      // Predicated region
      $region41: #{tpu_custom_call.1} parent=5 // pred_check
        %p314 = pneg %p313
      $region42: #{tpu_custom_call.1} parent=5 // pred_check_branch
        %316 = sbr.rel (%p314) target = $region44
      $region43: #{tpu_custom_call.1} parent=5 // pred_region
        %s317 = ssub.s32 %s15, 2
        // Predicated region
        $region45: #{tpu_custom_call.1} parent=43 // pred_check
          %p318 = pneg %p112
        $region46: #{tpu_custom_call.1} parent=43 // pred_check_branch
          %320 = sbr.rel (%p318) target = $region48
        $region47: #{tpu_custom_call.1} parent=43 // pred_region
          %s321 = sand.u32 %s97, 1
          %s322 = scalar_lea.sflag [#allocation4], %s321
          %s323 = sand.u32 %s97, 1
          %s324 = smul.addr %s323, 8
          %s325 = scalar_lea.vmem [#allocation7], %s324
          %327 = dma.done %s322, 128
        $region48: #{tpu_custom_call.1} parent=43 // pred_fallthru
          _
      $region44: #{tpu_custom_call.1} parent=5 // pred_fallthru
        _
    $region6: #{tpu_custom_call.1} parent=1 // loop_footer
      %s19 = sadd.s32 1, %s15
    $region7: #{tpu_custom_call.1} parent=1 // loop_footer_branch
      %14 = sbr.rel target = $region3
    $region8: #{tpu_custom_call.1} parent=1 // loop_exit
      _
    %328 = vsyncpa [#allocation3], 1
    %s329 = scalar_lea.sflag [#allocation3], 1
    %330 = vsyncpa %s329, 1
    %331 = vsyncpa [#allocation6], 1
    %332 = vsyncpa [#allocation4], 1
    %s333 = scalar_lea.sflag [#allocation4], 1
    %334 = vsyncpa %s333, 1

</llo_original>
